<compile_context>
chip_gen: v6e
topology: v6e:2x2x1
jax: 0.10.0
libtpu: 0.0.40
codegen_flags: <defaults>
</compile_context>

<pallas_src>
import functools

import jax
import jax.numpy as jnp
from jax import lax
from jax.experimental import pallas as pl
from jax.experimental.pallas import tpu as pltpu


def _round_up(a, b):
    return (a + b - 1) // b * b


def _cdiv(a, b):
    return (a + b - 1) // b


# ---------------------------------------------------------------------------
# Kernel 1: build the DoG filter bank, tiled along the flattened pixel axis.
# ---------------------------------------------------------------------------
def dog_filter_kernel(xg_ref, yg_ref, p_ref, dog_ref):
    # xg_ref / yg_ref : (1, TK)    flattened meshgrid chunk
    # p_ref           : (6, L, 1)  [mu_x, mu_y, A_c, A_s, neg_inv_c, neg_inv_s]
    # dog_ref         : (L, TK)    filter chunk
    X = xg_ref[...]                      # (1, TK)
    Y = yg_ref[...]                      # (1, TK)
    mu_x = p_ref[0]                      # (L, 1)
    mu_y = p_ref[1]
    A_c = p_ref[2]
    A_s = p_ref[3]
    neg_inv_c = p_ref[4]                 # -1/(2*sigma_c^2), hoisted to wrapper
    neg_inv_s = p_ref[5]                 # -1/(2*sigma_s^2)

    dx = X - mu_x                        # (L, TK) via broadcast
    dy = Y - mu_y
    r2 = dx * dx + dy * dy
    dog_ref[...] = A_c * jnp.exp(r2 * neg_inv_c) - A_s * jnp.exp(r2 * neg_inv_s)


# ---------------------------------------------------------------------------
# Kernel 2a (dog VMEM-resident): the whole (L, HW_pad) bank is fetched once
# (constant block index) and sliced per k-step inside the kernel.
# ---------------------------------------------------------------------------
def dog_matmul_resident_kernel(x_ref, dog_ref, o_ref, *, tk):
    k = pl.program_id(1)

    @pl.when(k == 0)
    def _():
        o_ref[...] = jnp.zeros_like(o_ref)

    start = pl.multiple_of(k * tk, 128)
    dog_tile = dog_ref[:, pl.ds(start, tk)]            # (L, TK)
    o_ref[...] += lax.dot_general(
        dog_tile, x_ref[...],
        dimension_numbers=(((1,), (1,)), ((), ())),
        preferred_element_type=jnp.float32)


# ---------------------------------------------------------------------------
# Kernel 2b (fallback): dog streamed per (i, k) tile when it doesn't fit VMEM.
# ---------------------------------------------------------------------------
def dog_matmul_tiled_kernel(x_ref, dog_ref, o_ref):
    @pl.when(pl.program_id(1) == 0)
    def _():
        o_ref[...] = jnp.zeros_like(o_ref)

    o_ref[...] += lax.dot_general(
        dog_ref[...], x_ref[...],
        dimension_numbers=(((1,), (1,)), ((), ())),
        preferred_element_type=jnp.float32)


def _tile_plan(M, HW, L, tm_max, tk_max, vmem_budget):
    """Balanced tile plan: minimal 128-aligned padding, VMEM-budget aware."""
    L8 = _round_up(max(L, 1), 8)
    tm_cap, tk_cap = tm_max, tk_max
    while True:
        hw128 = _round_up(HW, 128)
        num_k = _cdiv(hw128, tk_cap)
        tk = _round_up(_cdiv(HW, num_k), 128)
        hw_pad = num_k * tk

        m128 = _round_up(M, 128)
        num_m = _cdiv(m128, tm_cap)
        tm = _round_up(_cdiv(M, num_m), 128)
        m_pad = num_m * tm

        # v7x has 2 TensorCores sharded along the "parallel" M axis: give it
        # >= 2 tiles whenever M allows it (harmless on single-TC v5e/v6e).
        # (For M <= 128 this is impossible without splitting the reduction.)
        if num_m == 1 and m_pad > 128:
            tm = _round_up(_cdiv(m_pad, 2), 128)
            num_m = _cdiv(m_pad, tm)
            m_pad = num_m * tm

        bytes_f32 = 4
        x_bytes = 2 * tm * tk * bytes_f32              # double-buffered x tile
        out_bytes = 2 * L8 * tm * bytes_f32            # resident output block
        dog_tile_bytes = 2 * L8 * tk * bytes_f32
        dog_res_bytes = 2 * L8 * hw_pad * bytes_f32

        tiled_total = x_bytes + out_bytes + dog_tile_bytes
        res_total = x_bytes + out_bytes + dog_res_bytes

        if tiled_total <= vmem_budget or (tk_cap <= 512 and tm_cap <= 128):
            dog_resident = res_total <= vmem_budget
            total = res_total if dog_resident else tiled_total
            return dict(tm=tm, tk=tk, num_m=num_m, num_k=num_k,
                        m_pad=m_pad, hw_pad=hw_pad,
                        dog_resident=dog_resident, plan_bytes=total)
        # Shrink and retry (rare: only for very large L*tk tiles).
        if tk_cap > 512:
            tk_cap //= 2
        else:
            tm_cap //= 2


def _vmem_limit(plan_bytes):
    # plan + 50% headroom, floored at 8 MiB, capped well under v7x's 64 MiB.
    return int(min(max(plan_bytes * 3 // 2 + (2 << 20), 8 << 20), 48 << 20))


def dog_layer_forward(x, params, input_size_x, input_size_y,
                      *, tm_max=512, tk_max=4096,
                      vmem_budget=40 * 1024 * 1024):
    """Forward of DifferenceOfGaussiangLayer.

    x: (B, C, H, W); params: dict of (L, 1) float32 arrays.
    Returns (B, C, L) float32, matching
    torch.tensordot(x.float(), dogs.float(), dims=((2, 3), (1, 2))).
    """
    B, C, H, W = x.shape
    assert H == input_size_x and W == input_size_y
    L = params["mu_x"].shape[0]
    HW = H * W
    M = B * C

    plan = _tile_plan(M, HW, L, tm_max, tk_max, vmem_budget)
    tm, tk = plan["tm"], plan["tk"]
    num_m, num_k = plan["num_m"], plan["num_k"]
    m_pad, hw_pad = plan["m_pad"], plan["hw_pad"]

    # ---- wrapper-side layout prep (plain XLA) --------------------------------
    x_arr = jnp.linspace(-1.0, 1.0, input_size_x, dtype=jnp.float32)
    y_arr = jnp.linspace(-1.0, 1.0, input_size_y, dtype=jnp.float32)
    Xg = jnp.broadcast_to(x_arr[:, None], (H, W)).reshape(1, HW)
    Yg = jnp.broadcast_to(y_arr[None, :], (H, W)).reshape(1, HW)
    Xg = jnp.pad(Xg, ((0, 0), (0, hw_pad - HW)))
    Yg = jnp.pad(Yg, ((0, 0), (0, hw_pad - HW)))

    p32 = {k_: v.astype(jnp.float32) for k_, v in params.items()}
    sigma_c = p32["sigma_1"]
    sigma_s = p32["sigma_1"] + p32["sigma_2"]
    neg_inv_c = -1.0 / (2.0 * sigma_c * sigma_c)       # (L, 1)
    neg_inv_s = -1.0 / (2.0 * sigma_s * sigma_s)
    packed = jnp.stack(
        [p32["mu_x"], p32["mu_y"], p32["A_c"], p32["A_s"],
         neg_inv_c, neg_inv_s], axis=0)                # (6, L, 1)

    # torch forward does x.float(); zero-pad rows/pixels (neutral for the dot).
    x_flat = x.astype(jnp.float32).reshape(M, HW)
    x_flat = jnp.pad(x_flat, ((0, m_pad - M), (0, hw_pad - HW)))

    # ---- filter bank, built once ---------------------------------------------
    L8 = _round_up(L, 8)
    k1_plan = (4 * 8 * tk * 4) + (2 * 6 * L8 * 128 * 4) + (2 * L8 * tk * 4)
    dog = pl.pallas_call(
        dog_filter_kernel,
        out_shape=jax.ShapeDtypeStruct((L, hw_pad), jnp.float32),
        grid=(num_k,),
        in_specs=[
            pl.BlockSpec((1, tk), lambda k: (0, k)),
            pl.BlockSpec((1, tk), lambda k: (0, k)),
            pl.BlockSpec((6, L, 1), lambda k: (0, 0, 0)),
        ],
        out_specs=pl.BlockSpec((L, tk), lambda k: (0, k)),
        compiler_params=pltpu.CompilerParams(
            dimension_semantics=("parallel",),
            vmem_limit_bytes=_vmem_limit(k1_plan)),
    )(Xg, Yg, packed)

    # ---- main contraction (M tiles parallel, HW tiles reduce) ----------------
    if plan["dog_resident"]:
        mm_kernel = functools.partial(dog_matmul_resident_kernel, tk=tk)
        dog_spec = pl.BlockSpec((L, hw_pad), lambda i, k: (0, 0))  # fetched once
    else:
        mm_kernel = dog_matmul_tiled_kernel
        dog_spec = pl.BlockSpec((L, tk), lambda i, k: (0, k))

    out_t = pl.pallas_call(
        mm_kernel,
        out_shape=jax.ShapeDtypeStruct((L, m_pad), jnp.float32),
        grid=(num_m, num_k),
        in_specs=[
            pl.BlockSpec((tm, tk), lambda i, k: (i, k)),
            dog_spec,
        ],
        out_specs=pl.BlockSpec((L, tm), lambda i, k: (0, i)),
        compiler_params=pltpu.CompilerParams(
            dimension_semantics=("parallel", "arbitrary"),
            vmem_limit_bytes=_vmem_limit(plan["plan_bytes"])),
    )(x_flat, dog)

    # (L, M_pad) -> (M, L) -> (B, C, L); tiny XLA transpose outside the kernel.
    return out_t[:, :M].T.reshape(B, C, L)


def init_dog_params(key, num_lgn_units, input_size_x, input_size_y):
    """Deterministic parameter init mirroring the module's __init__ bounds."""
    eps = float(jnp.finfo(jnp.float64).eps)
    sigma_lo = 1.0 / max(int(0.82 * input_size_x), int(0.82 * input_size_y))
    k = jax.random.split(key, 6)
    shape = (num_lgn_units, 1)
    return {
        "mu_x": jax.random.uniform(k[0], shape, jnp.float32, -0.8, 0.8),
        "mu_y": jax.random.uniform(k[1], shape, jnp.float32, -0.8, 0.8),
        "A_c": jax.random.uniform(k[2], shape, jnp.float32, eps, 10.0),
        "A_s": jax.random.uniform(k[3], shape, jnp.float32, eps, 10.0),
        "sigma_1": jax.random.uniform(k[4], shape, jnp.float32, sigma_lo, 1.0),
        "sigma_2": jax.random.uniform(k[5], shape, jnp.float32, sigma_lo, 1.0),
    }


if __name__ == "__main__":
    B, C, H, W = 2, 4, 16, 16
    num_lgn_units = 8

    key = jax.random.PRNGKey(0)
    k_x, k_p = jax.random.split(key)
    x = jax.random.normal(k_x, (B, C, H, W), dtype=jnp.float32)
    params = init_dog_params(k_p, num_lgn_units, H, W)

    out = dog_layer_forward(x, params, H, W)
    out = jax.block_until_ready(out)
    assert out.shape == (B, C, num_lgn_units)

    # Pure-JAX reference of the same forward semantics.
    x_arr = jnp.linspace(-1.0, 1.0, H)
    y_arr = jnp.linspace(-1.0, 1.0, W)
    Xg, Yg = jnp.meshgrid(x_arr, y_arr, indexing="ij")
    mux = params["mu_x"][:, :, None]; muy = params["mu_y"][:, :, None]
    Ac = params["A_c"][:, :, None]; As = params["A_s"][:, :, None]
    s_c = params["sigma_1"][:, :, None]
    s_s = (params["sigma_1"] + params["sigma_2"])[:, :, None]
    dxg = Xg[None] - mux; dyg = Yg[None] - muy
    g_c = Ac * jnp.exp(-(dxg**2 + dyg**2) / (2 * s_c**2))
    g_s = As * jnp.exp(-(dxg**2 + dyg**2) / (2 * s_s**2))
    dogs = g_c - g_s
    ref = jnp.tensordot(x.astype(jnp.float32), dogs, axes=((2, 3), (1, 2)))
    assert jnp.allclose(out, ref, atol=1e-3, rtol=1e-3)

    print("KERNEL_OK")
</pallas_src>

<mosaic_0001>
module attributes {stable_mosaic.version = 11 : i64} {
  func.func @dog_filter_kernel(%arg0: i32, %arg1: memref<1x256xf32, #tpu.memory_space<vmem>>, %arg2: memref<1x256xf32, #tpu.memory_space<vmem>>, %arg3: memref<6x8x1xf32, #tpu.memory_space<vmem>>, %arg4: memref<8x256xf32, #tpu.memory_space<vmem>>) attributes {dimension_semantics = [#tpu.dimension_semantics<parallel>], iteration_bounds = array<i64: 1>, scalar_prefetch = 0 : i64, scratch_operands = 0 : i64, tpu.core_type = #tpu.core_type<tc>, window_params = [{transform_indices = @transform_0, window_bounds = array<i64: 1, 256>}, {transform_indices = @transform_1, window_bounds = array<i64: 1, 256>}, {pipeline_mode = #tpu.pipeline_mode<synchronous>, transform_indices = @transform_2, window_bounds = array<i64: 6, 8, 1>}, {transform_indices = @transform_3, window_bounds = array<i64: 8, 256>}]} {
    %c0 = arith.constant 0 : index
    %c0_0 = arith.constant 0 : index
    %0 = vector.load %arg1[%c0, %c0_0] : memref<1x256xf32, #tpu.memory_space<vmem>>, vector<1x256xf32>
    %c0_1 = arith.constant 0 : index
    %c0_2 = arith.constant 0 : index
    %1 = vector.load %arg2[%c0_1, %c0_2] : memref<1x256xf32, #tpu.memory_space<vmem>>, vector<1x256xf32>
    %c0_3 = arith.constant 0 : index
    %c0_4 = arith.constant 0 : index
    %c0_5 = arith.constant 0 : index
    %2 = vector.load %arg3[%c0_3, %c0_4, %c0_5] : memref<6x8x1xf32, #tpu.memory_space<vmem>>, vector<1x8x1xf32>
    %3 = vector.shape_cast %2 : vector<1x8x1xf32> to vector<8x1xf32>
    %c1 = arith.constant 1 : index
    %c0_6 = arith.constant 0 : index
    %c0_7 = arith.constant 0 : index
    %4 = vector.load %arg3[%c1, %c0_6, %c0_7] : memref<6x8x1xf32, #tpu.memory_space<vmem>>, vector<1x8x1xf32>
    %5 = vector.shape_cast %4 : vector<1x8x1xf32> to vector<8x1xf32>
    %c2 = arith.constant 2 : index
    %c0_8 = arith.constant 0 : index
    %c0_9 = arith.constant 0 : index
    %6 = vector.load %arg3[%c2, %c0_8, %c0_9] : memref<6x8x1xf32, #tpu.memory_space<vmem>>, vector<1x8x1xf32>
    %7 = vector.shape_cast %6 : vector<1x8x1xf32> to vector<8x1xf32>
    %c3 = arith.constant 3 : index
    %c0_10 = arith.constant 0 : index
    %c0_11 = arith.constant 0 : index
    %8 = vector.load %arg3[%c3, %c0_10, %c0_11] : memref<6x8x1xf32, #tpu.memory_space<vmem>>, vector<1x8x1xf32>
    %9 = vector.shape_cast %8 : vector<1x8x1xf32> to vector<8x1xf32>
    %c4 = arith.constant 4 : index
    %c0_12 = arith.constant 0 : index
    %c0_13 = arith.constant 0 : index
    %10 = vector.load %arg3[%c4, %c0_12, %c0_13] : memref<6x8x1xf32, #tpu.memory_space<vmem>>, vector<1x8x1xf32>
    %11 = vector.shape_cast %10 : vector<1x8x1xf32> to vector<8x1xf32>
    %c5 = arith.constant 5 : index
    %c0_14 = arith.constant 0 : index
    %c0_15 = arith.constant 0 : index
    %12 = vector.load %arg3[%c5, %c0_14, %c0_15] : memref<6x8x1xf32, #tpu.memory_space<vmem>>, vector<1x8x1xf32>
    %13 = vector.shape_cast %12 : vector<1x8x1xf32> to vector<8x1xf32>
    %14 = vector.broadcast %0 : vector<1x256xf32> to vector<8x256xf32>
    %15 = vector.broadcast %3 : vector<8x1xf32> to vector<8x256xf32>
    %16 = arith.subf %14, %15 : vector<8x256xf32>
    %17 = vector.broadcast %1 : vector<1x256xf32> to vector<8x256xf32>
    %18 = vector.broadcast %5 : vector<8x1xf32> to vector<8x256xf32>
    %19 = arith.subf %17, %18 : vector<8x256xf32>
    %20 = arith.mulf %16, %16 : vector<8x256xf32>
    %21 = arith.mulf %19, %19 : vector<8x256xf32>
    %22 = arith.addf %20, %21 : vector<8x256xf32>
    %23 = vector.broadcast %11 : vector<8x1xf32> to vector<8x256xf32>
    %24 = arith.mulf %22, %23 : vector<8x256xf32>
    %25 = math.exp %24 : vector<8x256xf32>
    %26 = vector.broadcast %7 : vector<8x1xf32> to vector<8x256xf32>
    %27 = arith.mulf %26, %25 : vector<8x256xf32>
    %28 = vector.broadcast %13 : vector<8x1xf32> to vector<8x256xf32>
    %29 = arith.mulf %22, %28 : vector<8x256xf32>
    %30 = math.exp %29 : vector<8x256xf32>
    %31 = vector.broadcast %9 : vector<8x1xf32> to vector<8x256xf32>
    %32 = arith.mulf %31, %30 : vector<8x256xf32>
    %33 = arith.subf %27, %32 : vector<8x256xf32>
    %c0_16 = arith.constant 0 : index
    %c0_17 = arith.constant 0 : index
    %34 = vector.load %arg4[%c0_16, %c0_17] : memref<8x256xf32, #tpu.memory_space<vmem>>, vector<8x256xf32>
    tpu.vector_store %arg4[%c0_16, %c0_17], %33 {strides = array<i32>} : memref<8x256xf32, #tpu.memory_space<vmem>>, vector<8x256xf32>,
    return
  }
  func.func @transform_0(%arg0: i32) -> (i32, i32) {
    %c0_i32 = arith.constant 0 : i32
    %c0_i32_0 = arith.constant 0 : i32
    return %c0_i32, %arg0 : i32, i32
  }
  func.func @transform_1(%arg0: i32) -> (i32, i32) {
    %c0_i32 = arith.constant 0 : i32
    %c0_i32_0 = arith.constant 0 : i32
    return %c0_i32, %arg0 : i32, i32
  }
  func.func @transform_2(%arg0: i32) -> (i32, i32, i32) {
    %c0_i32 = arith.constant 0 : i32
    %c0_i32_0 = arith.constant 0 : i32
    %c0_i32_1 = arith.constant 0 : i32
    %c0_i32_2 = arith.constant 0 : i32
    return %c0_i32, %c0_i32_0, %c0_i32_1 : i32, i32, i32
  }
  func.func @transform_3(%arg0: i32) -> (i32, i32) {
    %c0_i32 = arith.constant 0 : i32
    %c0_i32_0 = arith.constant 0 : i32
    return %c0_i32, %arg0 : i32, i32
  }
}

</mosaic_0001>

<llo_original>
// kernel: tpu_custom_call.1
$region0: #{tpu_custom_call.1}
  #allocation0 [shape = 'u32[]', space=smem, size = 0x4, offset = 0x4, fixed_abs, tag = 'smem constant byte address 0x4 - core index']
  #allocation1 [shape = 'u32[144,128]{1,0:T(1,128)}', space=vmem, size = 0x12000, scoped, tag = 'internal scratch']
  %s0 = inlined_call_operand.vmem [shape: f32[1,256], index: 0, kind: input, shape index: {}]
  %s1 = inlined_call_operand.vmem [shape: f32[1,256], index: 1, kind: input, shape index: {}]
  %s2 = inlined_call_operand.vmem [shape: f32[6,8,1], index: 2, kind: input, shape index: {}]
  %s3 = inlined_call_operand.hbm [shape: f32[8,256], index: 3, kind: output, shape index: {}]
  %s4 = sld [smem:[#allocation0]]
  $region22: #{tpu_custom_call.1} parent=0
    _
  %s6 = ssub.s32 1, %s4
  %s7 = scalar_select 0, %s6, %s4
  $region1: #{tpu_custom_call.1} parent=0
    #allocation2 [shape = 'u8[8192]{0}', space=vmem, size = 0x2000, scoped, tag = 'output window, operand 0, single buffered']
    #allocation3 [shape = 's32[1]{0}', space=sflag, size = 0x4, scoped, tag = 'scoped memory for tpu_custom_call.1']
    %8 = vsyncpa [#allocation3], 0
    // Predicated region
    $region2: #{tpu_custom_call.1} parent=1 // pred_check
      _
    $region3: #{tpu_custom_call.1} parent=1 // pred_check_branch
      %10 = sbr.rel (0) target = $region5
    $region4: #{tpu_custom_call.1} parent=1 // pred_region
      _
    $region5: #{tpu_custom_call.1} parent=1 // pred_fallthru
      _
    // Predicated region
    $region6: #{tpu_custom_call.1} parent=1 // pred_check
      _
    $region7: #{tpu_custom_call.1} parent=1 // pred_check_branch
      %12 = sbr.rel (0) target = $region9
    $region8: #{tpu_custom_call.1} parent=1 // pred_region
      _
    $region9: #{tpu_custom_call.1} parent=1 // pred_fallthru
      _
    // Predicated region
    $region10: #{tpu_custom_call.1} parent=1 // pred_check
      _
    $region11: #{tpu_custom_call.1} parent=1 // pred_check_branch
      %14 = sbr.rel (0) target = $region13
    $region12: #{tpu_custom_call.1} parent=1 // pred_region
      _
    $region13: #{tpu_custom_call.1} parent=1 // pred_fallthru
      _
    %v15 = vld [vmem:[%s0] sm:$0x3]
    %v16 = vld [vmem:[%s1] sm:$0x3]
    %v17 = vld [vmem:[%s2] sm:$0xff]
    %s18 = scalar_lea.vmem %s2, 8
    %v19 = vld [vmem:[%s18] sm:$0xff]
    %s20 = scalar_lea.vmem %s2, 16
    %v21 = vld [vmem:[%s20] sm:$0xff]
    %s22 = scalar_lea.vmem %s2, 24
    %v23 = vld [vmem:[%s22] sm:$0xff]
    %s24 = scalar_lea.vmem %s2, 32
    %v25 = vld [vmem:[%s24] sm:$0xff]
    %s26 = scalar_lea.vmem %s2, 40
    %v27 = vld [vmem:[%s26] sm:$0xff]
    %v29 = vlaneseq
    %v30 = vshrl.u32 %v29, 7
    %v31 = vsub.s32 0, %v30
    %v32 = vrot.slane %v15, %v31
    %v33 = vlaneseq
    %v34 = vshrl.u32 %v33, 7
    %v35 = vsub.s32 1, %v34
    %v36 = vrot.slane %v15, %v35
    %40 = vset.pattern.permute.xlu0 0
    %41 = vperm.xlu0 %40, %v17
    %v42 = vpop.permute.xlu0 %41
    %v44 = vsub.f32 %v32, %v42
    %v45 = vsub.f32 %v36, %v42
    %v47 = vlaneseq
    %v48 = vshrl.u32 %v47, 7
    %v49 = vsub.s32 0, %v48
    %v50 = vrot.slane %v16, %v49
    %v51 = vlaneseq
    %v52 = vshrl.u32 %v51, 7
    %v53 = vsub.s32 1, %v52
    %v54 = vrot.slane %v16, %v53
    %58 = vset.pattern.permute.xlu0 0
    %59 = vperm.xlu0 %58, %v19
    %v60 = vpop.permute.xlu0 %59
    %v62 = vsub.f32 %v50, %v60
    %v63 = vsub.f32 %v54, %v60
    %v64 = vmul.f32 %v44, %v44
    %v65 = vmul.f32 %v45, %v45
    %v66 = vmul.f32 %v62, %v62
    %v67 = vmul.f32 %v63, %v63
    %v68 = vadd.f32 %v64, %v66
    %v69 = vadd.f32 %v65, %v67
    %71 = vset.pattern.permute.xlu0 0
    %72 = vperm.xlu0 %71, %v25
    %v73 = vpop.permute.xlu0 %72
    %v75 = vmul.f32 %v68, %v73
    %v76 = vmul.f32 %v69, %v73
    %v77 = vmul.f32 %v75, 1.442695
    %v78 = vpow.pop %v77
    %v79 = vmul.f32 %v76, 1.442695
    %v80 = vpow.pop %v79
    %82 = vset.pattern.permute.xlu0 0
    %83 = vperm.xlu0 %82, %v21
    %v84 = vpop.permute.xlu0 %83
    %v86 = vmul.f32 %v84, %v78
    %v87 = vmul.f32 %v84, %v80
    %89 = vset.pattern.permute.xlu0 0
    %90 = vperm.xlu0 %89, %v27
    %v91 = vpop.permute.xlu0 %90
    %v93 = vmul.f32 %v68, %v91
    %v94 = vmul.f32 %v69, %v91
    %v95 = vmul.f32 %v93, 1.442695
    %v96 = vpow.pop %v95
    %v97 = vmul.f32 %v94, 1.442695
    %v98 = vpow.pop %v97
    %100 = vset.pattern.permute.xlu0 0
    %101 = vperm.xlu0 %100, %v23
    %v102 = vpop.permute.xlu0 %101
    %v104 = vmul.f32 %v102, %v96
    %v105 = vmul.f32 %v102, %v98
    %v106 = vsub.f32 %v86, %v104
    %v107 = vsub.f32 %v87, %v105
    %108 = vst [vmem:[#allocation2] sm:$0xff] %v106
    %109 = vst [vmem:[#allocation2 + $0x8] sm:$0xff] %v107
    // Predicated region
    $region14: #{tpu_custom_call.1} parent=1 // pred_check
      _
    $region15: #{tpu_custom_call.1} parent=1 // pred_check_branch
      %111 = sbr.rel (0) target = $region17
    $region16: #{tpu_custom_call.1} parent=1 // pred_region
      %s113 = ssub.s32 256, 256
      %114 = vsyncadd [#allocation3], %s113
      %s116 = sshll.u32 [#allocation2], 4
      %s117 = int_to_ptr.vmem [resolvable:$true] %s116
      %119 = dma.vmem_to_hbm [thread:$0]  %s117, 256, %s3, [#allocation3]
    $region17: #{tpu_custom_call.1} parent=1 // pred_fallthru
      _
    // Predicated region
    $region18: #{tpu_custom_call.1} parent=1 // pred_check
      _
    $region19: #{tpu_custom_call.1} parent=1 // pred_check_branch
      %121 = sbr.rel (0) target = $region21
    $region20: #{tpu_custom_call.1} parent=1 // pred_region
      %122 = dma.done [#allocation3], 256
    $region21: #{tpu_custom_call.1} parent=1 // pred_fallthru
      _
    %123 = vsyncpa [#allocation3], 1

</llo_original>
